<compile_context>
chip_gen: v5e
topology: v5e:2x2
jax: 0.10.0
libtpu: 0.0.40
codegen_flags: <defaults>
</compile_context>

<pallas_src>
import functools

import numpy as np
import jax
import jax.numpy as jnp
from jax.experimental import pallas as pl
from jax.experimental.pallas import tpu as pltpu


# ---------------------------------------------------------------------------
# Fused Pallas kernel: cov_flat = offset + sum_k (x @ W_eff^T + b)[i,k] * (...)[j,k]
# ---------------------------------------------------------------------------

def _fused_cov_kernel(x_ref, wt_ref, b_ref, pa_ref, pb_ref, off_ref, out_ref, *, dim):
    """One batch tile per grid step.

    x_ref   : (TILE_N, B)        input features
    wt_ref  : (B, D*D)           W_eff^T (tril scatter folded in)
    b_ref   : (1, D*D)           b_eff
    pa_ref  : (D*D, D*D*D)       0/1 selection: chunk k holds L[n, i, k] at lane i*D+j
    pb_ref  : (D*D, D*D*D)       0/1 selection: chunk k holds L[n, j, k] at lane i*D+j
    off_ref : (1, D*D)           flattened offset * I
    out_ref : (TILE_N, D*D)      lane-dense flat covariance
    """
    dd = dim * dim
    # MXU: flat lower-triangular Cholesky factor, L_flat[n, i*D+k] = L[n, i, k].
    l_flat = (
        jnp.dot(x_ref[...], wt_ref[...], preferred_element_type=jnp.float32)
        + b_ref[...]
    )
    # MXU (0/1 matrices -> pure lane replication of L entries, stays lane-dense,
    # no reshapes / gathers needed):
    #   a_all[:, k*DD + i*D + j] = L[n, i, k]
    #   b_all[:, k*DD + i*D + j] = L[n, j, k]
    a_all = jnp.dot(l_flat, pa_ref[...], preferred_element_type=jnp.float32)
    b_all = jnp.dot(l_flat, pb_ref[...], preferred_element_type=jnp.float32)
    # VPU multiply-accumulate over k: cov[n, i*D+j] = sum_k L[n,i,k] * L[n,j,k].
    cov = a_all[:, 0:dd] * b_all[:, 0:dd]
    for k in range(1, dim):
        sl = slice(k * dd, (k + 1) * dd)
        cov = cov + a_all[:, sl] * b_all[:, sl]
    out_ref[...] = cov + off_ref[...]


def fused_full_covariance(x, w_eff_t, b_eff, p_a, p_b, off_flat, dim, tile_n=512):
    """x: (N, B) -> covariance (N, D, D), all in a single batch-tiled pallas_call."""
    n, b = x.shape
    dd = dim * dim
    tile_n = min(tile_n, n)                    # small batches: one full-array block
    grid = (pl.cdiv(n, tile_n),)               # partial last block handled by masking

    kernel = functools.partial(_fused_cov_kernel, dim=dim)
    cov_flat = pl.pallas_call(
        kernel,
        grid=grid,
        out_shape=jax.ShapeDtypeStruct((n, dd), jnp.float32),
        in_specs=[
            pl.BlockSpec((tile_n, b), lambda i: (i, 0)),       # x: tiled over batch
            pl.BlockSpec((b, dd), lambda i: (0, 0)),           # W_eff^T (resident)
            pl.BlockSpec((1, dd), lambda i: (0, 0)),           # b_eff
            pl.BlockSpec((dd, dim * dd), lambda i: (0, 0)),    # P_A
            pl.BlockSpec((dd, dim * dd), lambda i: (0, 0)),    # P_B
            pl.BlockSpec((1, dd), lambda i: (0, 0)),           # offset (flattened)
        ],
        out_specs=pl.BlockSpec((tile_n, dd), lambda i: (i, 0)),  # lane-dense output
        compiler_params=pltpu.CompilerParams(
            dimension_semantics=("parallel",),        # shard batch tiles on v7x megacore
            vmem_limit_bytes=32 * 1024 * 1024,        # explicit, with headroom on v7x (64 MiB phys)
        ),
    )(x, w_eff_t, b_eff, p_a, p_b, off_flat)
    return cov_flat.reshape(n, dim, dim)


# ---------------------------------------------------------------------------
# Module
# ---------------------------------------------------------------------------

def _orthogonal(key, rows, cols, gain=1.0):
    """Deterministic orthogonal init (QR of a random normal), like torch.nn.init.orthogonal_."""
    if rows >= cols:
        a = jax.random.normal(key, (rows, cols), jnp.float32)
        q, r = jnp.linalg.qr(a)
        q = q * jnp.sign(jnp.diag(r))
        return gain * q
    else:
        a = jax.random.normal(key, (cols, rows), jnp.float32)
        q, r = jnp.linalg.qr(a)
        q = q * jnp.sign(jnp.diag(r))
        return gain * q.T


class FullCovarianceModule:
    """JAX/Pallas port of pyrobolearn's FullCovarianceModule (batched forward)."""

    def __init__(self, num_inputs, num_outputs, offset=0.0001, key=None):
        if key is None:
            key = jax.random.PRNGKey(0)
        d = num_outputs
        self._dim = d
        dd = d * d
        rows, cols = np.tril_indices(d)
        num_tril = len(rows)                              # D*(D+1)/2
        flat_idx = rows * d + cols

        # Canonical learnable params (same semantics as torch.nn.Linear(B, T)).
        self.weight = _orthogonal(key, num_tril, num_inputs, gain=1.0)   # (T, B)
        self.bias = jnp.zeros((num_tril,), jnp.float32)

        # Fold the tril scatter into the weights: columns of W_eff^T at tril positions
        # are the rows of W; everything else (upper triangle) is an exact zero column.
        # NOTE: if weight/bias are updated during training, re-derive these.
        w_eff_t = np.zeros((num_inputs, dd), np.float32)
        w_eff_t[:, flat_idx] = np.asarray(self.weight).T
        b_eff = np.zeros((dd,), np.float32)
        b_eff[flat_idx] = np.asarray(self.bias)
        self.w_eff_t = jnp.asarray(w_eff_t)                              # (B, D*D)
        self.b_eff = jnp.asarray(b_eff).reshape(1, dd)                   # (1, D*D)

        # Static 0/1 selection matrices for the in-kernel L @ L^T (size ~ D^4 floats;
        # D here is the action dimension, i.e. small).
        p_a = np.zeros((dd, d * dd), np.float32)
        p_b = np.zeros((dd, d * dd), np.float32)
        for i in range(d):
            for j in range(d):
                for k in range(d):
                    col = k * dd + i * d + j
                    p_a[i * d + k, col] = 1.0
                    p_b[j * d + k, col] = 1.0
        self.p_a = jnp.asarray(p_a)
        self.p_b = jnp.asarray(p_b)

        # Flattened offset * I, added lane-dense in the kernel epilogue.
        self.off_flat = jnp.asarray(
            (offset * np.eye(d, dtype=np.float32)).reshape(1, dd))

    def __call__(self, x):
        x = jnp.asarray(x, jnp.float32)
        if x.ndim == 1:
            # TODO(synk): the PyTorch 1-D branch (matmul(x, x.t()) + offset) is
            # shape-inconsistent in the original code; we promote to a batch of 1 instead.
            x = x[None, :]
        return fused_full_covariance(
            x, self.w_eff_t, self.b_eff, self.p_a, self.p_b, self.off_flat, self._dim)


# ---------------------------------------------------------------------------
# Demo / correctness check
# ---------------------------------------------------------------------------

if __name__ == "__main__":
    key = jax.random.PRNGKey(0)
    k_mod, k_x = jax.random.split(key)

    batch = 2
    num_inputs = 32   # size of the base output vector
    num_outputs = 8   # D: size of the action mean vector

    module = FullCovarianceModule(num_inputs, num_outputs, offset=0.0001, key=k_mod)
    x = jax.random.normal(k_x, (batch, num_inputs), jnp.float32)

    cov = module(x)
    cov = jax.block_until_ready(cov)

    # Pure-JAX reference (mirrors the PyTorch forward).
    rows, cols = np.tril_indices(num_outputs)
    y_ref = x @ module.weight.T + module.bias
    L_ref = jnp.zeros((batch, num_outputs, num_outputs), jnp.float32)
    L_ref = L_ref.at[:, rows, cols].set(y_ref)
    cov_ref = jnp.einsum("nik,njk->nij", L_ref, L_ref) + 0.0001 * jnp.eye(num_outputs)

    assert cov.shape == (batch, num_outputs, num_outputs)
    assert jnp.allclose(cov, cov_ref, atol=1e-4, rtol=1e-4), "mismatch vs reference"

    print("KERNEL_OK")
</pallas_src>

<mosaic_0001>
module attributes {stable_mosaic.version = 11 : i64} {
  func.func @_fused_cov_kernel(%arg0: i32, %arg1: memref<2x32xf32, #tpu.memory_space<vmem>>, %arg2: memref<32x64xf32, #tpu.memory_space<vmem>>, %arg3: memref<1x64xf32, #tpu.memory_space<vmem>>, %arg4: memref<64x512xf32, #tpu.memory_space<vmem>>, %arg5: memref<64x512xf32, #tpu.memory_space<vmem>>, %arg6: memref<1x64xf32, #tpu.memory_space<vmem>>, %arg7: memref<2x64xf32, #tpu.memory_space<vmem>>) attributes {dimension_semantics = [#tpu.dimension_semantics<parallel>], iteration_bounds = array<i64: 1>, scalar_prefetch = 0 : i64, scratch_operands = 0 : i64, tpu.core_type = #tpu.core_type<tc>, window_params = [{transform_indices = @transform_0, window_bounds = array<i64: 2, 32>}, {pipeline_mode = #tpu.pipeline_mode<synchronous>, transform_indices = @transform_1, window_bounds = array<i64: 32, 64>}, {pipeline_mode = #tpu.pipeline_mode<synchronous>, transform_indices = @transform_2, window_bounds = array<i64: 1, 64>}, {pipeline_mode = #tpu.pipeline_mode<synchronous>, transform_indices = @transform_3, window_bounds = array<i64: 64, 512>}, {pipeline_mode = #tpu.pipeline_mode<synchronous>, transform_indices = @transform_4, window_bounds = array<i64: 64, 512>}, {pipeline_mode = #tpu.pipeline_mode<synchronous>, transform_indices = @transform_5, window_bounds = array<i64: 1, 64>}, {transform_indices = @transform_6, window_bounds = array<i64: 2, 64>}]} {
    %c0 = arith.constant 0 : index
    %c0_0 = arith.constant 0 : index
    %0 = vector.load %arg1[%c0, %c0_0] : memref<2x32xf32, #tpu.memory_space<vmem>>, vector<2x32xf32>
    %c0_1 = arith.constant 0 : index
    %c0_2 = arith.constant 0 : index
    %1 = vector.load %arg2[%c0_1, %c0_2] : memref<32x64xf32, #tpu.memory_space<vmem>>, vector<32x64xf32>
    %cst = arith.constant dense<0.000000e+00> : vector<2x64xf32>
    %2 = tpu.matmul %0, %1, %cst {dimension_numbers = #tpu.dot_dimension_numbers<[1], [0], [0], [1], [0, 0, 1, 1], [], []>} : vector<2x32xf32>, vector<32x64xf32>, vector<2x64xf32> -> vector<2x64xf32>
    %c0_3 = arith.constant 0 : index
    %c0_4 = arith.constant 0 : index
    %3 = vector.load %arg3[%c0_3, %c0_4] : memref<1x64xf32, #tpu.memory_space<vmem>>, vector<1x64xf32>
    %4 = vector.broadcast %3 : vector<1x64xf32> to vector<2x64xf32>
    %5 = arith.addf %2, %4 : vector<2x64xf32>
    %c0_5 = arith.constant 0 : index
    %c0_6 = arith.constant 0 : index
    %6 = vector.load %arg4[%c0_5, %c0_6] : memref<64x512xf32, #tpu.memory_space<vmem>>, vector<64x512xf32>
    %cst_7 = arith.constant dense<0.000000e+00> : vector<2x512xf32>
    %7 = tpu.matmul %5, %6, %cst_7 {dimension_numbers = #tpu.dot_dimension_numbers<[1], [0], [0], [1], [0, 0, 1, 1], [], []>} : vector<2x64xf32>, vector<64x512xf32>, vector<2x512xf32> -> vector<2x512xf32>
    %c0_8 = arith.constant 0 : index
    %c0_9 = arith.constant 0 : index
    %8 = vector.load %arg5[%c0_8, %c0_9] : memref<64x512xf32, #tpu.memory_space<vmem>>, vector<64x512xf32>
    %cst_10 = arith.constant dense<0.000000e+00> : vector<2x512xf32>
    %9 = tpu.matmul %5, %8, %cst_10 {dimension_numbers = #tpu.dot_dimension_numbers<[1], [0], [0], [1], [0, 0, 1, 1], [], []>} : vector<2x64xf32>, vector<64x512xf32>, vector<2x512xf32> -> vector<2x512xf32>
    %10 = vector.extract_strided_slice %7 {offsets = [0, 0], sizes = [2, 64], strides = [1, 1]} : vector<2x512xf32> to vector<2x64xf32>
    %11 = vector.extract_strided_slice %9 {offsets = [0, 0], sizes = [2, 64], strides = [1, 1]} : vector<2x512xf32> to vector<2x64xf32>
    %12 = arith.mulf %10, %11 : vector<2x64xf32>
    %13 = vector.extract_strided_slice %7 {offsets = [0, 64], sizes = [2, 64], strides = [1, 1]} : vector<2x512xf32> to vector<2x64xf32>
    %14 = vector.extract_strided_slice %9 {offsets = [0, 64], sizes = [2, 64], strides = [1, 1]} : vector<2x512xf32> to vector<2x64xf32>
    %15 = arith.mulf %13, %14 : vector<2x64xf32>
    %16 = arith.addf %12, %15 : vector<2x64xf32>
    %17 = vector.extract_strided_slice %7 {offsets = [0, 128], sizes = [2, 64], strides = [1, 1]} : vector<2x512xf32> to vector<2x64xf32>
    %18 = vector.extract_strided_slice %9 {offsets = [0, 128], sizes = [2, 64], strides = [1, 1]} : vector<2x512xf32> to vector<2x64xf32>
    %19 = arith.mulf %17, %18 : vector<2x64xf32>
    %20 = arith.addf %16, %19 : vector<2x64xf32>
    %21 = vector.extract_strided_slice %7 {offsets = [0, 192], sizes = [2, 64], strides = [1, 1]} : vector<2x512xf32> to vector<2x64xf32>
    %22 = vector.extract_strided_slice %9 {offsets = [0, 192], sizes = [2, 64], strides = [1, 1]} : vector<2x512xf32> to vector<2x64xf32>
    %23 = arith.mulf %21, %22 : vector<2x64xf32>
    %24 = arith.addf %20, %23 : vector<2x64xf32>
    %25 = vector.extract_strided_slice %7 {offsets = [0, 256], sizes = [2, 64], strides = [1, 1]} : vector<2x512xf32> to vector<2x64xf32>
    %26 = vector.extract_strided_slice %9 {offsets = [0, 256], sizes = [2, 64], strides = [1, 1]} : vector<2x512xf32> to vector<2x64xf32>
    %27 = arith.mulf %25, %26 : vector<2x64xf32>
    %28 = arith.addf %24, %27 : vector<2x64xf32>
    %29 = vector.extract_strided_slice %7 {offsets = [0, 320], sizes = [2, 64], strides = [1, 1]} : vector<2x512xf32> to vector<2x64xf32>
    %30 = vector.extract_strided_slice %9 {offsets = [0, 320], sizes = [2, 64], strides = [1, 1]} : vector<2x512xf32> to vector<2x64xf32>
    %31 = arith.mulf %29, %30 : vector<2x64xf32>
    %32 = arith.addf %28, %31 : vector<2x64xf32>
    %33 = vector.extract_strided_slice %7 {offsets = [0, 384], sizes = [2, 64], strides = [1, 1]} : vector<2x512xf32> to vector<2x64xf32>
    %34 = vector.extract_strided_slice %9 {offsets = [0, 384], sizes = [2, 64], strides = [1, 1]} : vector<2x512xf32> to vector<2x64xf32>
    %35 = arith.mulf %33, %34 : vector<2x64xf32>
    %36 = arith.addf %32, %35 : vector<2x64xf32>
    %37 = vector.extract_strided_slice %7 {offsets = [0, 448], sizes = [2, 64], strides = [1, 1]} : vector<2x512xf32> to vector<2x64xf32>
    %38 = vector.extract_strided_slice %9 {offsets = [0, 448], sizes = [2, 64], strides = [1, 1]} : vector<2x512xf32> to vector<2x64xf32>
    %39 = arith.mulf %37, %38 : vector<2x64xf32>
    %40 = arith.addf %36, %39 : vector<2x64xf32>
    %c0_11 = arith.constant 0 : index
    %c0_12 = arith.constant 0 : index
    %41 = vector.load %arg6[%c0_11, %c0_12] : memref<1x64xf32, #tpu.memory_space<vmem>>, vector<1x64xf32>
    %42 = vector.broadcast %41 : vector<1x64xf32> to vector<2x64xf32>
    %43 = arith.addf %40, %42 : vector<2x64xf32>
    %c0_13 = arith.constant 0 : index
    %c0_14 = arith.constant 0 : index
    %44 = vector.load %arg7[%c0_13, %c0_14] : memref<2x64xf32, #tpu.memory_space<vmem>>, vector<2x64xf32>
    tpu.vector_store %arg7[%c0_13, %c0_14], %43 {strides = array<i32>} : memref<2x64xf32, #tpu.memory_space<vmem>>, vector<2x64xf32>,
    return
  }
  func.func @transform_0(%arg0: i32) -> (i32, i32) {
    %c0_i32 = arith.constant 0 : i32
    %c0_i32_0 = arith.constant 0 : i32
    return %arg0, %c0_i32 : i32, i32
  }
  func.func @transform_1(%arg0: i32) -> (i32, i32) {
    %c0_i32 = arith.constant 0 : i32
    %c0_i32_0 = arith.constant 0 : i32
    %c0_i32_1 = arith.constant 0 : i32
    return %c0_i32, %c0_i32_0 : i32, i32
  }
  func.func @transform_2(%arg0: i32) -> (i32, i32) {
    %c0_i32 = arith.constant 0 : i32
    %c0_i32_0 = arith.constant 0 : i32
    %c0_i32_1 = arith.constant 0 : i32
    return %c0_i32, %c0_i32_0 : i32, i32
  }
  func.func @transform_3(%arg0: i32) -> (i32, i32) {
    %c0_i32 = arith.constant 0 : i32
    %c0_i32_0 = arith.constant 0 : i32
    %c0_i32_1 = arith.constant 0 : i32
    return %c0_i32, %c0_i32_0 : i32, i32
  }
  func.func @transform_4(%arg0: i32) -> (i32, i32) {
    %c0_i32 = arith.constant 0 : i32
    %c0_i32_0 = arith.constant 0 : i32
    %c0_i32_1 = arith.constant 0 : i32
    return %c0_i32, %c0_i32_0 : i32, i32
  }
  func.func @transform_5(%arg0: i32) -> (i32, i32) {
    %c0_i32 = arith.constant 0 : i32
    %c0_i32_0 = arith.constant 0 : i32
    %c0_i32_1 = arith.constant 0 : i32
    return %c0_i32, %c0_i32_0 : i32, i32
  }
  func.func @transform_6(%arg0: i32) -> (i32, i32) {
    %c0_i32 = arith.constant 0 : i32
    %c0_i32_0 = arith.constant 0 : i32
    return %arg0, %c0_i32 : i32, i32
  }
}

</mosaic_0001>

<llo_original>
// kernel: tpu_custom_call.1
$region0: #{tpu_custom_call.1}
  #allocation0 [shape = 'u32[]', space=smem, size = 0x4, offset = 0x4, fixed_abs, tag = 'smem constant byte address 0x4 - core index']
  #allocation1 [shape = 'u32[72,128]{1,0:T(1,128)}', space=vmem, size = 0x9000, scoped, tag = 'internal scratch']
  %s0 = inlined_call_operand.hbm [shape: f32[2,32], index: 0, kind: input, shape index: {}]
  %s1 = inlined_call_operand.hbm [shape: f32[32,64], index: 1, kind: input, shape index: {}]
  %s2 = inlined_call_operand.vmem [shape: f32[1,64], index: 2, kind: input, shape index: {}]
  %s3 = inlined_call_operand.hbm [shape: f32[64,512], index: 3, kind: input, shape index: {}]
  %s4 = inlined_call_operand.hbm [shape: f32[64,512], index: 4, kind: input, shape index: {}]
  %s5 = inlined_call_operand.vmem [shape: f32[1,64], index: 5, kind: input, shape index: {}]
  %s6 = inlined_call_operand.hbm [shape: f32[2,64], index: 6, kind: output, shape index: {}]
  %s7 = sld [smem:[#allocation0]]
  $region50: #{tpu_custom_call.1} parent=0
    _
  %s9 = ssub.s32 1, %s7
  %s10 = scalar_select 0, %s9, %s7
  $region1: #{tpu_custom_call.1} parent=0
    #allocation2 [shape = 'u8[1024]{0}', space=vmem, size = 0x400, scoped, tag = 'input window, operand 0, single buffered']
    #allocation3 [shape = 's32[1]{0}', space=sflag, size = 0x4, scoped, tag = 'scoped memory for tpu_custom_call.1']
    #allocation4 [shape = 's32[1]{0}', space=sflag, size = 0x4, scoped, tag = 'scoped memory for tpu_custom_call.1']
    #allocation5 [shape = 'u8[16384]{0}', space=vmem, size = 0x4000, scoped, tag = 'input window, operand 1, single buffered']
    #allocation6 [shape = 's32[1]{0}', space=sflag, size = 0x4, scoped, tag = 'scoped memory for tpu_custom_call.1']
    #allocation7 [shape = 'u8[131072]{0}', space=vmem, size = 0x20000, scoped, tag = 'input window, operand 3, single buffered']
    #allocation8 [shape = 'u8[131072]{0}', space=vmem, size = 0x20000, scoped, tag = 'input window, operand 4, single buffered']
    #allocation9 [shape = 's32[1]{0}', space=sflag, size = 0x4, scoped, tag = 'scoped memory for tpu_custom_call.1']
    #allocation10 [shape = 'u8[1024]{0}', space=vmem, size = 0x400, scoped, tag = 'output window, operand 0, single buffered']
    %11 = vsyncpa [#allocation3], 0
    %12 = vsyncpa [#allocation6], 0
    %13 = vsyncpa [#allocation9], 0
    %14 = vsyncpa [#allocation4], 0
    // Predicated region
    $region2: #{tpu_custom_call.1} parent=1 // pred_check
      _
    $region3: #{tpu_custom_call.1} parent=1 // pred_check_branch
      %16 = sbr.rel (0) target = $region5
    $region4: #{tpu_custom_call.1} parent=1 // pred_region
      %18 = vsyncadd [#allocation3], 0
      %s20 = sshll.u32 %s0, 4
      %s21 = int_to_ptr.hbm [resolvable:$true] %s20
      %s22 = sshll.u32 [#allocation2], 4
      %s23 = int_to_ptr.vmem [resolvable:$true] %s22
      %25 = dma.hbm_to_vmem [thread:$0]  %s21, 32, %s23, [#allocation3]
    $region5: #{tpu_custom_call.1} parent=1 // pred_fallthru
      _
    // Predicated region
    $region6: #{tpu_custom_call.1} parent=1 // pred_check
      _
    $region7: #{tpu_custom_call.1} parent=1 // pred_check_branch
      %27 = sbr.rel (0) target = $region9
    $region8: #{tpu_custom_call.1} parent=1 // pred_region
      %29 = vsyncadd [#allocation6], 0
      %s30 = sshll.u32 %s1, 4
      %s31 = int_to_ptr.hbm [resolvable:$true] %s30
      %s32 = sshll.u32 [#allocation5], 4
      %s33 = int_to_ptr.vmem [resolvable:$true] %s32
      %38 = dma.hbm_to_vmem [thread:$0]  %s31, 512, %s33, [#allocation6], 128, 128, 8
    $region9: #{tpu_custom_call.1} parent=1 // pred_fallthru
      _
    // Predicated region
    $region10: #{tpu_custom_call.1} parent=1 // pred_check
      _
    $region11: #{tpu_custom_call.1} parent=1 // pred_check_branch
      %40 = sbr.rel (0) target = $region13
    $region12: #{tpu_custom_call.1} parent=1 // pred_region
      _
    $region13: #{tpu_custom_call.1} parent=1 // pred_fallthru
      _
    // Predicated region
    $region14: #{tpu_custom_call.1} parent=1 // pred_check
      _
    $region15: #{tpu_custom_call.1} parent=1 // pred_check_branch
      %42 = sbr.rel (0) target = $region17
    $region16: #{tpu_custom_call.1} parent=1 // pred_region
      %44 = vsyncadd [#allocation6], 0
      %s45 = sshll.u32 %s3, 4
      %s46 = int_to_ptr.hbm [resolvable:$true] %s45
      %s47 = sshll.u32 [#allocation7], 4
      %s48 = int_to_ptr.vmem [resolvable:$true] %s47
      %53 = dma.hbm_to_vmem [thread:$0]  %s46, 4096, %s48, [#allocation6], 512, 512, 32
    $region17: #{tpu_custom_call.1} parent=1 // pred_fallthru
      _
    // Predicated region
    $region18: #{tpu_custom_call.1} parent=1 // pred_check
      _
    $region19: #{tpu_custom_call.1} parent=1 // pred_check_branch
      %55 = sbr.rel (0) target = $region21
    $region20: #{tpu_custom_call.1} parent=1 // pred_region
      %57 = vsyncadd [#allocation9], 0
      %s58 = sshll.u32 %s4, 4
      %s59 = int_to_ptr.hbm [resolvable:$true] %s58
      %s60 = sshll.u32 [#allocation8], 4
      %s61 = int_to_ptr.vmem [resolvable:$true] %s60
      %66 = dma.hbm_to_vmem [thread:$0]  %s59, 4096, %s61, [#allocation9], 512, 512, 32
    $region21: #{tpu_custom_call.1} parent=1 // pred_fallthru
      _
    // Predicated region
    $region22: #{tpu_custom_call.1} parent=1 // pred_check
      _
    $region23: #{tpu_custom_call.1} parent=1 // pred_check_branch
      %68 = sbr.rel (0) target = $region25
    $region24: #{tpu_custom_call.1} parent=1 // pred_region
      _
    $region25: #{tpu_custom_call.1} parent=1 // pred_fallthru
      _
    // Predicated region
    $region26: #{tpu_custom_call.1} parent=1 // pred_check
      _
    $region27: #{tpu_custom_call.1} parent=1 // pred_check_branch
      %70 = sbr.rel (0) target = $region29
    $region28: #{tpu_custom_call.1} parent=1 // pred_region
      %72 = dma.done [#allocation3], 32
    $region29: #{tpu_custom_call.1} parent=1 // pred_fallthru
      _
    // Predicated region
    $region30: #{tpu_custom_call.1} parent=1 // pred_check
      _
    $region31: #{tpu_custom_call.1} parent=1 // pred_check_branch
      %74 = sbr.rel (0) target = $region33
    $region32: #{tpu_custom_call.1} parent=1 // pred_region
      %76 = dma.done [#allocation6], 512
    $region33: #{tpu_custom_call.1} parent=1 // pred_fallthru
      _
    // Predicated region
    $region34: #{tpu_custom_call.1} parent=1 // pred_check
      _
    $region35: #{tpu_custom_call.1} parent=1 // pred_check_branch
      %78 = sbr.rel (0) target = $region37
    $region36: #{tpu_custom_call.1} parent=1 // pred_region
      %80 = dma.done [#allocation6], 4096
    $region37: #{tpu_custom_call.1} parent=1 // pred_fallthru
      _
    // Predicated region
    $region38: #{tpu_custom_call.1} parent=1 // pred_check
      _
    $region39: #{tpu_custom_call.1} parent=1 // pred_check_branch
      %82 = sbr.rel (0) target = $region41
    $region40: #{tpu_custom_call.1} parent=1 // pred_region
      %84 = dma.done [#allocation9], 4096
    $region41: #{tpu_custom_call.1} parent=1 // pred_fallthru
      _
    %v85 = vld [vmem:[#allocation2] sm:$0x3]
    %v86 = vld [vmem:[#allocation5] sm:$0xff]
    %v87 = vld [vmem:[#allocation5 + $0x8] sm:$0xff]
    %v88 = vld [vmem:[#allocation5 + $0x10] sm:$0xff]
    %v89 = vld [vmem:[#allocation5 + $0x18] sm:$0xff]
    %v90 = vld [vmem:[%s2] sm:$0x1]
    %v92 = vperm.slane %v90, 0
    %vm94 = vcmask 261120
    %v96 = vsel %vm94, %v85, 0
    %98 = vmatpush.msra.mxu0 0.0
    %99 = vmatpush.msra.mxu0 0.0
    %100 = vmatpush.msra.mxu0 0.0
    %101 = vmatpush.msra.mxu0 0.0
    %102 = vmatpush.msra.mxu0 0.0
    %103 = vmatpush.msra.mxu0 0.0
    %104 = vmatpush.msra.mxu0 0.0
    %105 = vmatpush.msra.mxu0 0.0
    %106 = vmatpush.msra.mxu0 0.0
    %107 = vmatpush.msra.mxu0 0.0
    %108 = vmatpush.msra.mxu0 0.0
    %109 = vmatpush.msra.mxu0 0.0
    %110 = vmatpush.msra.mxu0 %v89
    %111 = vmatpush.msra.mxu0 %v88
    %112 = vmatpush.msra.mxu0 %v87
    %113 = vmatpush.msra.mxu0 %v86
    %114 = vmatmul.f32.gmra.mxu0 %v96
    %v115 = vpop.f32.mrf.mxu0
    %v116 = vadd.f32 %v92, %v115
    %117 = vdwg.mxu0
    %v118 = vld [vmem:[#allocation7] sm:$0xff]
    %v119 = vld [vmem:[#allocation7 + $0x8] sm:$0xff]
    %v120 = vld [vmem:[#allocation7 + $0x10] sm:$0xff]
    %v121 = vld [vmem:[#allocation7 + $0x18] sm:$0xff]
    %v122 = vld [vmem:[#allocation7 + $0x20] sm:$0xff]
    %v123 = vld [vmem:[#allocation7 + $0x28] sm:$0xff]
    %v124 = vld [vmem:[#allocation7 + $0x30] sm:$0xff]
    %v125 = vld [vmem:[#allocation7 + $0x38] sm:$0xff]
    %v126 = vld [vmem:[#allocation7 + $0x40] sm:$0xff]
    %v127 = vld [vmem:[#allocation7 + $0x48] sm:$0xff]
    %v128 = vld [vmem:[#allocation7 + $0x50] sm:$0xff]
    %v129 = vld [vmem:[#allocation7 + $0x58] sm:$0xff]
    %v130 = vld [vmem:[#allocation7 + $0x60] sm:$0xff]
    %v131 = vld [vmem:[#allocation7 + $0x68] sm:$0xff]
    %v132 = vld [vmem:[#allocation7 + $0x70] sm:$0xff]
    %v133 = vld [vmem:[#allocation7 + $0x78] sm:$0xff]
    %v134 = vld [vmem:[#allocation7 + $0x80] sm:$0xff]
    %v135 = vld [vmem:[#allocation7 + $0x88] sm:$0xff]
    %v136 = vld [vmem:[#allocation7 + $0x90] sm:$0xff]
    %v137 = vld [vmem:[#allocation7 + $0x98] sm:$0xff]
    %v138 = vld [vmem:[#allocation7 + $0xa0] sm:$0xff]
    %v139 = vld [vmem:[#allocation7 + $0xa8] sm:$0xff]
    %v140 = vld [vmem:[#allocation7 + $0xb0] sm:$0xff]
    %v141 = vld [vmem:[#allocation7 + $0xb8] sm:$0xff]
    %v142 = vld [vmem:[#allocation7 + $0xc0] sm:$0xff]
    %v143 = vld [vmem:[#allocation7 + $0xc8] sm:$0xff]
    %v144 = vld [vmem:[#allocation7 + $0xd0] sm:$0xff]
    %v145 = vld [vmem:[#allocation7 + $0xd8] sm:$0xff]
    %v146 = vld [vmem:[#allocation7 + $0xe0] sm:$0xff]
    %v147 = vld [vmem:[#allocation7 + $0xe8] sm:$0xff]
    %v148 = vld [vmem:[#allocation7 + $0xf0] sm:$0xff]
    %v149 = vld [vmem:[#allocation7 + $0xf8] sm:$0xff]
    %vm150 = vcmask 523264
    %v152 = vsel %vm150, %v116, 0
    %154 = vmatpush.msra.mxu0 0.0
    %155 = vmatpush.msra.mxu0 0.0
    %156 = vmatpush.msra.mxu0 0.0
    %157 = vmatpush.msra.mxu0 0.0
    %158 = vmatpush.msra.mxu0 0.0
    %159 = vmatpush.msra.mxu0 0.0
    %160 = vmatpush.msra.mxu0 0.0
    %161 = vmatpush.msra.mxu0 0.0
    %162 = vmatpush.msra.mxu0 %v146
    %163 = vmatpush.msra.mxu0 %v142
    %164 = vmatpush.msra.mxu0 %v138
    %165 = vmatpush.msra.mxu0 %v134
    %166 = vmatpush.msra.mxu0 %v130
    %167 = vmatpush.msra.mxu0 %v126
    %168 = vmatpush.msra.mxu0 %v122
    %169 = vmatpush.msra.mxu0 %v118
    %170 = vmatmul.f32.gmra.mxu0 %v152
    %v171 = vpop.f32.mrf.mxu0
    %v172 = vadd.f32 0.0, %v171
    %173 = vdwg.mxu0
    %174 = vmatpush.msra.mxu0 0.0
    %175 = vmatpush.msra.mxu0 0.0
    %176 = vmatpush.msra.mxu0 0.0
    %177 = vmatpush.msra.mxu0 0.0
    %178 = vmatpush.msra.mxu0 0.0
    %179 = vmatpush.msra.mxu0 0.0
    %180 = vmatpush.msra.mxu0 0.0
    %181 = vmatpush.msra.mxu0 0.0
    %182 = vmatpush.msra.mxu0 %v147
    %183 = vmatpush.msra.mxu0 %v143
    %184 = vmatpush.msra.mxu0 %v139
    %185 = vmatpush.msra.mxu0 %v135
    %186 = vmatpush.msra.mxu0 %v131
    %187 = vmatpush.msra.mxu0 %v127
    %188 = vmatpush.msra.mxu0 %v123
    %189 = vmatpush.msra.mxu0 %v119
    %190 = vmatmul.f32.gmra.mxu0 %v152
    %v191 = vpop.f32.mrf.mxu0
    %v192 = vadd.f32 0.0, %v191
    %193 = vdwg.mxu0
    %194 = vmatpush.msra.mxu0 0.0
    %195 = vmatpush.msra.mxu0 0.0
    %196 = vmatpush.msra.mxu0 0.0
    %197 = vmatpush.msra.mxu0 0.0
    %198 = vmatpush.msra.mxu0 0.0
    %199 = vmatpush.msra.mxu0 0.0
    %200 = vmatpush.msra.mxu0 0.0
    %201 = vmatpush.msra.mxu0 0.0
    %202 = vmatpush.msra.mxu0 %v148
    %203 = vmatpush.msra.mxu0 %v144
    %204 = vmatpush.msra.mxu0 %v140
    %205 = vmatpush.msra.mxu0 %v136
    %206 = vmatpush.msra.mxu0 %v132
    %207 = vmatpush.msra.mxu0 %v128
    %208 = vmatpush.msra.mxu0 %v124
    %209 = vmatpush.msra.mxu0 %v120
    %210 = vmatmul.f32.gmra.mxu0 %v152
    %v211 = vpop.f32.mrf.mxu0
    %v212 = vadd.f32 0.0, %v211
    %213 = vdwg.mxu0
    %214 = vmatpush.msra.mxu0 0.0
    %215 = vmatpush.msra.mxu0 0.0
    %216 = vmatpush.msra.mxu0 0.0
    %217 = vmatpush.msra.mxu0 0.0
    %218 = vmatpush.msra.mxu0 0.0
    %219 = vmatpush.msra.mxu0 0.0
    %220 = vmatpush.msra.mxu0 0.0
    %221 = vmatpush.msra.mxu0 0.0
    %222 = vmatpush.msra.mxu0 %v149
    %223 = vmatpush.msra.mxu0 %v145
    %224 = vmatpush.msra.mxu0 %v141
    %225 = vmatpush.msra.mxu0 %v137
    %226 = vmatpush.msra.mxu0 %v133
    %227 = vmatpush.msra.mxu0 %v129
    %228 = vmatpush.msra.mxu0 %v125
    %229 = vmatpush.msra.mxu0 %v121
    %230 = vmatmul.f32.gmra.mxu0 %v152
    %v231 = vpop.f32.mrf.mxu0
    %v232 = vadd.f32 0.0, %v231
    %233 = vdwg.mxu0
    %v234 = vld [vmem:[#allocation8] sm:$0xff]
    %v235 = vld [vmem:[#allocation8 + $0x8] sm:$0xff]
    %v236 = vld [vmem:[#allocation8 + $0x10] sm:$0xff]
    %v237 = vld [vmem:[#allocation8 + $0x18] sm:$0xff]
    %v238 = vld [vmem:[#allocation8 + $0x20] sm:$0xff]
    %v239 = vld [vmem:[#allocation8 + $0x28] sm:$0xff]
    %v240 = vld [vmem:[#allocation8 + $0x30] sm:$0xff]
    %v241 = vld [vmem:[#allocation8 + $0x38] sm:$0xff]
    %v242 = vld [vmem:[#allocation8 + $0x40] sm:$0xff]
    %v243 = vld [vmem:[#allocation8 + $0x48] sm:$0xff]
    %v244 = vld [vmem:[#allocation8 + $0x50] sm:$0xff]
    %v245 = vld [vmem:[#allocation8 + $0x58] sm:$0xff]
    %v246 = vld [vmem:[#allocation8 + $0x60] sm:$0xff]
    %v247 = vld [vmem:[#allocation8 + $0x68] sm:$0xff]
    %v248 = vld [vmem:[#allocation8 + $0x70] sm:$0xff]
    %v249 = vld [vmem:[#allocation8 + $0x78] sm:$0xff]
    %v250 = vld [vmem:[#allocation8 + $0x80] sm:$0xff]
    %v251 = vld [vmem:[#allocation8 + $0x88] sm:$0xff]
    %v252 = vld [vmem:[#allocation8 + $0x90] sm:$0xff]
    %v253 = vld [vmem:[#allocation8 + $0x98] sm:$0xff]
    %v254 = vld [vmem:[#allocation8 + $0xa0] sm:$0xff]
    %v255 = vld [vmem:[#allocation8 + $0xa8] sm:$0xff]
    %v256 = vld [vmem:[#allocation8 + $0xb0] sm:$0xff]
    %v257 = vld [vmem:[#allocation8 + $0xb8] sm:$0xff]
    %v258 = vld [vmem:[#allocation8 + $0xc0] sm:$0xff]
    %v259 = vld [vmem:[#allocation8 + $0xc8] sm:$0xff]
    %v260 = vld [vmem:[#allocation8 + $0xd0] sm:$0xff]
    %v261 = vld [vmem:[#allocation8 + $0xd8] sm:$0xff]
    %v262 = vld [vmem:[#allocation8 + $0xe0] sm:$0xff]
    %v263 = vld [vmem:[#allocation8 + $0xe8] sm:$0xff]
    %v264 = vld [vmem:[#allocation8 + $0xf0] sm:$0xff]
    %v265 = vld [vmem:[#allocation8 + $0xf8] sm:$0xff]
    %266 = vmatpush.msra.mxu0 0.0
    %267 = vmatpush.msra.mxu0 0.0
    %268 = vmatpush.msra.mxu0 0.0
    %269 = vmatpush.msra.mxu0 0.0
    %270 = vmatpush.msra.mxu0 0.0
    %271 = vmatpush.msra.mxu0 0.0
    %272 = vmatpush.msra.mxu0 0.0
    %273 = vmatpush.msra.mxu0 0.0
    %274 = vmatpush.msra.mxu0 %v262
    %275 = vmatpush.msra.mxu0 %v258
    %276 = vmatpush.msra.mxu0 %v254
    %277 = vmatpush.msra.mxu0 %v250
    %278 = vmatpush.msra.mxu0 %v246
    %279 = vmatpush.msra.mxu0 %v242
    %280 = vmatpush.msra.mxu0 %v238
    %281 = vmatpush.msra.mxu0 %v234
    %282 = vmatmul.f32.gmra.mxu0 %v152
    %v283 = vpop.f32.mrf.mxu0
    %v284 = vadd.f32 0.0, %v283
    %285 = vdwg.mxu0
    %286 = vmatpush.msra.mxu0 0.0
    %287 = vmatpush.msra.mxu0 0.0
    %288 = vmatpush.msra.mxu0 0.0
    %289 = vmatpush.msra.mxu0 0.0
    %290 = vmatpush.msra.mxu0 0.0
    %291 = vmatpush.msra.mxu0 0.0
    %292 = vmatpush.msra.mxu0 0.0
    %293 = vmatpush.msra.mxu0 0.0
    %294 = vmatpush.msra.mxu0 %v263
    %295 = vmatpush.msra.mxu0 %v259
    %296 = vmatpush.msra.mxu0 %v255
    %297 = vmatpush.msra.mxu0 %v251
    %298 = vmatpush.msra.mxu0 %v247
    %299 = vmatpush.msra.mxu0 %v243
    %300 = vmatpush.msra.mxu0 %v239
    %301 = vmatpush.msra.mxu0 %v235
    %302 = vmatmul.f32.gmra.mxu0 %v152
    %v303 = vpop.f32.mrf.mxu0
    %v304 = vadd.f32 0.0, %v303
    %305 = vdwg.mxu0
    %306 = vmatpush.msra.mxu0 0.0
    %307 = vmatpush.msra.mxu0 0.0
    %308 = vmatpush.msra.mxu0 0.0
    %309 = vmatpush.msra.mxu0 0.0
    %310 = vmatpush.msra.mxu0 0.0
    %311 = vmatpush.msra.mxu0 0.0
    %312 = vmatpush.msra.mxu0 0.0
    %313 = vmatpush.msra.mxu0 0.0
    %314 = vmatpush.msra.mxu0 %v264
    %315 = vmatpush.msra.mxu0 %v260
    %316 = vmatpush.msra.mxu0 %v256
    %317 = vmatpush.msra.mxu0 %v252
    %318 = vmatpush.msra.mxu0 %v248
    %319 = vmatpush.msra.mxu0 %v244
    %320 = vmatpush.msra.mxu0 %v240
    %321 = vmatpush.msra.mxu0 %v236
    %322 = vmatmul.f32.gmra.mxu0 %v152
    %v323 = vpop.f32.mrf.mxu0
    %v324 = vadd.f32 0.0, %v323
    %325 = vdwg.mxu0
    %326 = vmatpush.msra.mxu0 0.0
    %327 = vmatpush.msra.mxu0 0.0
    %328 = vmatpush.msra.mxu0 0.0
    %329 = vmatpush.msra.mxu0 0.0
    %330 = vmatpush.msra.mxu0 0.0
    %331 = vmatpush.msra.mxu0 0.0
    %332 = vmatpush.msra.mxu0 0.0
    %333 = vmatpush.msra.mxu0 0.0
    %334 = vmatpush.msra.mxu0 %v265
    %335 = vmatpush.msra.mxu0 %v261
    %336 = vmatpush.msra.mxu0 %v257
    %337 = vmatpush.msra.mxu0 %v253
    %338 = vmatpush.msra.mxu0 %v249
    %339 = vmatpush.msra.mxu0 %v245
    %340 = vmatpush.msra.mxu0 %v241
    %341 = vmatpush.msra.mxu0 %v237
    %342 = vmatmul.f32.gmra.mxu0 %v152
    %v343 = vpop.f32.mrf.mxu0
    %v344 = vadd.f32 0.0, %v343
    %345 = vdwg.mxu0
    %v346 = vmul.f32 %v172, %v284
    %348 = vrot.lane.b32.xlu0 %v346, 64
    %v349 = vpop.permute.xlu0 %348
    %v351 = vadd.f32 %v346, %v349
    %v352 = vmul.f32 %v192, %v304
    %v353 = vadd.f32 %v351, %v352
    %355 = vrot.lane.b32.xlu0 %v352, 64
    %v356 = vpop.permute.xlu0 %355
    %v358 = vadd.f32 %v353, %v356
    %v359 = vmul.f32 %v212, %v324
    %v360 = vadd.f32 %v358, %v359
    %362 = vrot.lane.b32.xlu0 %v359, 64
    %v363 = vpop.permute.xlu0 %362
    %v365 = vadd.f32 %v360, %v363
    %v366 = vmul.f32 %v232, %v344
    %v367 = vadd.f32 %v365, %v366
    %369 = vrot.lane.b32.xlu0 %v366, 64
    %v370 = vpop.permute.xlu0 %369
    %v372 = vadd.f32 %v367, %v370
    %v373 = vld [vmem:[%s5] sm:$0x1]
    %v375 = vperm.slane %v373, 0
    %v377 = vadd.f32 %v372, %v375
    %vm378 = vcmask 517120
    %379 = vst.msk [vmem:[#allocation10] sm:$0x3] %vm378, %v377
    // Predicated region
    $region42: #{tpu_custom_call.1} parent=1 // pred_check
      _
    $region43: #{tpu_custom_call.1} parent=1 // pred_check_branch
      %381 = sbr.rel (0) target = $region45
    $region44: #{tpu_custom_call.1} parent=1 // pred_region
      %383 = vsyncadd [#allocation4], 0
      %s385 = sshll.u32 [#allocation10], 4
      %s386 = int_to_ptr.vmem [resolvable:$true] %s385
      %s387 = sshll.u32 %s6, 4
      %s388 = int_to_ptr.hbm [resolvable:$true] %s387
      %390 = dma.vmem_to_hbm [thread:$0]  %s386, 32, %s388, [#allocation4]
    $region45: #{tpu_custom_call.1} parent=1 // pred_fallthru
      _
    // Predicated region
    $region46: #{tpu_custom_call.1} parent=1 // pred_check
      _
    $region47: #{tpu_custom_call.1} parent=1 // pred_check_branch
      %392 = sbr.rel (0) target = $region49
    $region48: #{tpu_custom_call.1} parent=1 // pred_region
      %394 = dma.done [#allocation4], 32
    $region49: #{tpu_custom_call.1} parent=1 // pred_fallthru
      _
    %395 = vsyncpa [#allocation3], 1
    %396 = vsyncpa [#allocation6], 1
    %397 = vsyncpa [#allocation9], 1
    %398 = vsyncpa [#allocation4], 1

</llo_original>
